<compile_context>
chip_gen: v7x
topology: tpu7x:2x2x1
jax: 0.10.0
libtpu: 0.0.40
codegen_flags: <defaults>
</compile_context>

<pallas_src>
import math
from functools import partial

import jax
import jax.numpy as jnp
import numpy as np
from jax.experimental import pallas as pl
from jax.experimental.pallas import tpu as pltpu

_LANES = 512                # lane width of each row slab (multiple of 128)
_MAX_ROWS_PER_BLOCK = 1024  # 1024 rows * 512 lanes * 4 B * 2 feats = 4 MiB x / step


def asco_kernel(params_ref, x_ref, o_ref):
    # params_ref: SMEM (3,) f32 = [w_eff0, w_eff1, b_eff]
    # x_ref:      VMEM (2, TR, 512) f32   (feature, row-slab, lanes)
    # o_ref:      VMEM (TR, 512) f32
    w0 = params_ref[0]
    w1 = params_ref[1]
    b = params_ref[2]
    o_ref[...] = x_ref[0] * w0 + x_ref[1] * w1 + b


@partial(jax.jit, static_argnames=("max_block_rows",))
def asco_forward(x, w1, b1, w2, b2, *, max_block_rows=_MAX_ROWS_PER_BLOCK):
    """x: (B, 2) f32 -> (B, 1) f32; same math as linear2(linear1(x))."""
    B = x.shape[0]

    # Fold the two affine layers into a single one (exact composition, f32).
    w_eff = (w2 @ w1)[0]          # (2,)
    b_eff = w2 @ b1 + b2          # (1,)
    params = jnp.concatenate([w_eff, b_eff]).astype(jnp.float32)  # (3,)

    # Choose a row-block: multiple of 8, capped at max_block_rows, and pad the
    # row count so it divides evenly.  Each row is 512 batch elements.
    rows = pl.cdiv(B, _LANES)
    tr = min(max_block_rows, ((rows + 7) // 8) * 8)
    r_pad = pl.cdiv(rows, tr) * tr
    n_pad = r_pad * _LANES

    # Dense relayout (B,2) -> (2, r_pad, 512): one fused transpose+pad copy.
    xt = jnp.pad(x.T.astype(jnp.float32), ((0, 0), (0, n_pad - B)))
    xt = xt.reshape(2, r_pad, _LANES)

    out = pl.pallas_call(
        asco_kernel,
        out_shape=jax.ShapeDtypeStruct((r_pad, _LANES), jnp.float32),
        grid=(r_pad // tr,),
        in_specs=[
            pl.BlockSpec(memory_space=pltpu.MemorySpace.SMEM),       # 3 scalars
            pl.BlockSpec((2, tr, _LANES), lambda i: (0, i, 0)),      # x slab
        ],
        out_specs=pl.BlockSpec((tr, _LANES), lambda i: (i, 0)),
        compiler_params=pltpu.CompilerParams(
            dimension_semantics=("parallel",)),
    )(params, xt)

    # (r_pad, 512) -> flat -> drop padded tail -> (B, 1): reshapes/slice only.
    return out.reshape(n_pad)[:B].reshape(B, 1)


def _affine_forward_ref(x, w1, b1, w2, b2):
    """Plain-JAX reference / tiny-batch fast path (un-fused PyTorch math)."""
    return (x @ w1.T + b1) @ w2.T + b2


def init_params(key):
    """Deterministic init matching nn.Linear's default U(-1/sqrt(fan_in), ...)."""
    k1, k2, k3, k4 = jax.random.split(key, 4)
    bound = 1.0 / math.sqrt(2.0)  # fan_in = 2 for both layers
    w1 = jax.random.uniform(k1, (2, 2), jnp.float32, -bound, bound)  # [out, in]
    b1 = jax.random.uniform(k2, (2,), jnp.float32, -bound, bound)
    w2 = jax.random.uniform(k3, (1, 2), jnp.float32, -bound, bound)  # [out, in]
    b2 = jax.random.uniform(k4, (1,), jnp.float32, -bound, bound)
    return w1, b1, w2, b2


def predict_phi(params, C, K):
    """Python glue equivalent of ASCO.predict_phi (single-query host path).

    Uses the plain-JAX path: for B=1 the pallas_call dispatch + per-shape
    retrace would dominate the two fused multiply-adds by orders of magnitude.
    """
    w1, b1, w2, b2 = params
    inp = jnp.array([[C, K]], dtype=jnp.float32)
    phi_pred = float(_affine_forward_ref(inp, w1, b1, w2, b2)[0, 0])
    return int(np.ceil(max(1.0, min(phi_pred, float(C)))))


if __name__ == "__main__":
    key = jax.random.PRNGKey(0)
    kx, kp = jax.random.split(key)
    w1, b1, w2, b2 = init_params(kp)

    # Small batches (single block, adaptive small row-block).
    for B in (8, 300, 1500):
        xb = jax.random.normal(jax.random.fold_in(kx, B), (B, 2), dtype=jnp.float32)
        out = jax.block_until_ready(asco_forward(xb, w1, b1, w2, b2))
        ref = _affine_forward_ref(xb, w1, b1, w2, b2)
        np.testing.assert_allclose(
            np.asarray(out), np.asarray(ref), rtol=1e-5, atol=1e-5)

    # Multi-block grid path (small block override so the demo stays tiny:
    # 20_000 elems -> 40 rows -> 5 grid steps of 8 rows).
    B = 20_000
    xb = jax.random.normal(jax.random.fold_in(kx, B), (B, 2), dtype=jnp.float32)
    out = jax.block_until_ready(
        asco_forward(xb, w1, b1, w2, b2, max_block_rows=8))
    ref = _affine_forward_ref(xb, w1, b1, w2, b2)
    np.testing.assert_allclose(
        np.asarray(out), np.asarray(ref), rtol=1e-5, atol=1e-5)

    # Exercise the predict_phi glue path too.
    _ = predict_phi((w1, b1, w2, b2), 4.0, 2.0)

    print("KERNEL_OK")
</pallas_src>

<mosaic_0001>
module attributes {stable_mosaic.version = 11 : i64} {
  func.func @asco_kernel(%arg0: i32, %arg1: memref<3xf32, #tpu.memory_space<smem>>, %arg2: memref<2x8x512xf32, #tpu.memory_space<vmem>>, %arg3: memref<8x512xf32, #tpu.memory_space<vmem>>) attributes {dimension_semantics = [#tpu.dimension_semantics<parallel>], iteration_bounds = array<i64: 1>, scalar_prefetch = 0 : i64, scratch_operands = 0 : i64, tpu.core_type = #tpu.core_type<tc>, window_params = [{transform_indices = @transform_0, window_bounds = array<i64: 3>}, {transform_indices = @transform_1, window_bounds = array<i64: 2, 8, 512>}, {transform_indices = @transform_2, window_bounds = array<i64: 8, 512>}]} {
    %c0 = arith.constant 0 : index
    %0 = memref.load %arg1[%c0] : memref<3xf32, #tpu.memory_space<smem>>
    %c1 = arith.constant 1 : index
    %1 = memref.load %arg1[%c1] : memref<3xf32, #tpu.memory_space<smem>>
    %c2 = arith.constant 2 : index
    %2 = memref.load %arg1[%c2] : memref<3xf32, #tpu.memory_space<smem>>
    %c0_0 = arith.constant 0 : index
    %c0_1 = arith.constant 0 : index
    %c0_2 = arith.constant 0 : index
    %3 = vector.load %arg2[%c0_0, %c0_1, %c0_2] : memref<2x8x512xf32, #tpu.memory_space<vmem>>, vector<1x8x512xf32>
    %4 = vector.shape_cast %3 : vector<1x8x512xf32> to vector<8x512xf32>
    %5 = vector.broadcast %0 : f32 to vector<8x512xf32>
    %6 = arith.mulf %4, %5 : vector<8x512xf32>
    %c1_3 = arith.constant 1 : index
    %c0_4 = arith.constant 0 : index
    %c0_5 = arith.constant 0 : index
    %7 = vector.load %arg2[%c1_3, %c0_4, %c0_5] : memref<2x8x512xf32, #tpu.memory_space<vmem>>, vector<1x8x512xf32>
    %8 = vector.shape_cast %7 : vector<1x8x512xf32> to vector<8x512xf32>
    %9 = vector.broadcast %1 : f32 to vector<8x512xf32>
    %10 = arith.mulf %8, %9 : vector<8x512xf32>
    %11 = arith.addf %6, %10 : vector<8x512xf32>
    %12 = vector.broadcast %2 : f32 to vector<8x512xf32>
    %13 = arith.addf %11, %12 : vector<8x512xf32>
    %c0_6 = arith.constant 0 : index
    %c0_7 = arith.constant 0 : index
    %14 = vector.load %arg3[%c0_6, %c0_7] : memref<8x512xf32, #tpu.memory_space<vmem>>, vector<8x512xf32>
    tpu.vector_store %arg3[%c0_6, %c0_7], %13 {strides = array<i32>} : memref<8x512xf32, #tpu.memory_space<vmem>>, vector<8x512xf32>,
    return
  }
  func.func @transform_0(%arg0: i32) -> i32 {
    %c0_i32 = arith.constant 0 : i32
    %c0_i32_0 = arith.constant 0 : i32
    return %c0_i32 : i32
  }
  func.func @transform_1(%arg0: i32) -> (i32, i32, i32) {
    %c0_i32 = arith.constant 0 : i32
    %c0_i32_0 = arith.constant 0 : i32
    %c0_i32_1 = arith.constant 0 : i32
    return %c0_i32, %arg0, %c0_i32_0 : i32, i32, i32
  }
  func.func @transform_2(%arg0: i32) -> (i32, i32) {
    %c0_i32 = arith.constant 0 : i32
    %c0_i32_0 = arith.constant 0 : i32
    return %arg0, %c0_i32 : i32, i32
  }
}

</mosaic_0001>

<llo_original>
// kernel: asco_forward.1
$region0: #{asco_forward.1}
  #allocation0 [shape = 'u32[]', space=smem, size = 0x4, offset = 0x4, fixed_abs, tag = 'smem constant byte address 0x4 - core index']
  #allocation1 [shape = 'u32[144,128]{1,0:T(1,128)}', space=vmem, size = 0x12000, scoped, tag = 'internal scratch']
  %s0 = inlined_call_operand.vmem [shape: f32[3], index: 0, kind: input, shape index: {}]
  %s1 = inlined_call_operand.vmem [shape: f32[2,8,512], index: 1, kind: input, shape index: {}]
  %s2 = inlined_call_operand.vmem [shape: f32[8,512], index: 2, kind: output, shape index: {}]
  %s3 = sld [smem:[#allocation0]]
  $region22: #{asco_forward.1} parent=0
    _
  %s5 = ssub.s32 1, %s3
  %s6 = scalar_select 0, %s5, %s3
  $region1: #{asco_forward.1} parent=0
    #allocation2 [shape = 'u8[512]{0}', space=smem, size = 0x200, scoped, tag = 'input window, operand 0, single buffered']
    #allocation3 [shape = 's32[1]{0}', space=sflag, size = 0x4, scoped, tag = 'scoped memory for asco_forward.1']
    %7 = vsyncpa [#allocation3], 0
    // Predicated region
    $region2: #{asco_forward.1} parent=1 // pred_check
      _
    $region3: #{asco_forward.1} parent=1 // pred_check_branch
      %9 = sbr.rel (0) target = $region5
    $region4: #{asco_forward.1} parent=1 // pred_region
      %s11 = ssub.s32 16, 16
      %12 = vsyncadd [#allocation3], %s11
      %s14 = sshll.u32 %s0, 4
      %s15 = int_to_ptr.vmem [resolvable:$true] %s14
      %17 = dma.vmem_to_smem %s15, 16, [#allocation2], [#allocation3]
    $region5: #{asco_forward.1} parent=1 // pred_fallthru
      _
    // Predicated region
    $region6: #{asco_forward.1} parent=1 // pred_check
      _
    $region7: #{asco_forward.1} parent=1 // pred_check_branch
      %19 = sbr.rel (0) target = $region9
    $region8: #{asco_forward.1} parent=1 // pred_region
      _
    $region9: #{asco_forward.1} parent=1 // pred_fallthru
      _
    // Predicated region
    $region10: #{asco_forward.1} parent=1 // pred_check
      _
    $region11: #{asco_forward.1} parent=1 // pred_check_branch
      %21 = sbr.rel (0) target = $region13
    $region12: #{asco_forward.1} parent=1 // pred_region
      %22 = dma.done [#allocation3], 16
    $region13: #{asco_forward.1} parent=1 // pred_fallthru
      _
    %23 = sfence
    %s24 = sld [smem:[#allocation2]]
    %s25 = sld [smem:[#allocation2 + $0x1]]
    %s26 = sld [smem:[#allocation2 + $0x2]]
    %v27 = vld [vmem:[%s1] sm:$0xff]
    %v28 = vld [vmem:[%s1 + $0x8] sm:$0xff]
    %v29 = vld [vmem:[%s1 + $0x10] sm:$0xff]
    %v30 = vld [vmem:[%s1 + $0x18] sm:$0xff]
    %v31 = vstv %s24
    %v32 = vmul.f32 %v27, %v31
    %v33 = vmul.f32 %v28, %v31
    %v34 = vmul.f32 %v29, %v31
    %v35 = vmul.f32 %v30, %v31
    %s36 = scalar_lea.vmem %s1, 32
    %v37 = vld [vmem:[%s36] sm:$0xff]
    %v38 = vld [vmem:[%s36 + $0x8] sm:$0xff]
    %v39 = vld [vmem:[%s36 + $0x10] sm:$0xff]
    %v40 = vld [vmem:[%s36 + $0x18] sm:$0xff]
    %v41 = vstv %s25
    %v42 = vmul.f32 %v37, %v41
    %v43 = vmul.f32 %v38, %v41
    %v44 = vmul.f32 %v39, %v41
    %v45 = vmul.f32 %v40, %v41
    %v46 = vadd.f32 %v32, %v42
    %v47 = vadd.f32 %v33, %v43
    %v48 = vadd.f32 %v34, %v44
    %v49 = vadd.f32 %v35, %v45
    %v50 = vstv %s26
    %v51 = vadd.f32 %v46, %v50
    %v52 = vadd.f32 %v47, %v50
    %v53 = vadd.f32 %v48, %v50
    %v54 = vadd.f32 %v49, %v50
    %55 = vst [vmem:[%s2] sm:$0xff] %v51
    %56 = vst [vmem:[%s2 + $0x8] sm:$0xff] %v52
    %57 = vst [vmem:[%s2 + $0x10] sm:$0xff] %v53
    %58 = vst [vmem:[%s2 + $0x18] sm:$0xff] %v54
    // Predicated region
    $region14: #{asco_forward.1} parent=1 // pred_check
      _
    $region15: #{asco_forward.1} parent=1 // pred_check_branch
      %60 = sbr.rel (0) target = $region17
    $region16: #{asco_forward.1} parent=1 // pred_region
      _
    $region17: #{asco_forward.1} parent=1 // pred_fallthru
      _
    // Predicated region
    $region18: #{asco_forward.1} parent=1 // pred_check
      _
    $region19: #{asco_forward.1} parent=1 // pred_check_branch
      %62 = sbr.rel (0) target = $region21
    $region20: #{asco_forward.1} parent=1 // pred_region
      _
    $region21: #{asco_forward.1} parent=1 // pred_fallthru
      _
    %63 = vsyncpa [#allocation3], 1

</llo_original>
